<compile_context>
chip_gen: v7x
topology: tpu7x:2x2x1
jax: 0.10.0
libtpu: 0.0.40
codegen_flags: <defaults>
</compile_context>

<pallas_src>
import functools

import jax
import jax.numpy as jnp
from jax import lax
from jax.experimental import pallas as pl
from jax.experimental.pallas import tpu as pltpu
import numpy as np


OMEGA0 = 30.0
_LANE = 128
_ONE_HOT_GATHER_MAX_NODES = 256


def _round_up(x, m):
    return (x + m - 1) // m * m


@functools.lru_cache(maxsize=None)
def _tpu_config():
    """Returns (tile_cap, vmem_limit_bytes, want_two_grid_steps)."""
    # Conservative (v7x-safe) defaults: 64 MiB VMEM per core, 2 TensorCores.
    tile_cap, vmem_limit, two_steps = 4096, 32 * 1024 * 1024, True
    try:
        info = pltpu.get_tpu_info()
        vmem = int(getattr(info, "vmem_capacity_bytes", 0))
        if vmem >= 100 * 1024 * 1024:
            # v5e / v6e: 128 MiB VMEM, single TensorCore -> fewer, bigger tiles.
            tile_cap, vmem_limit, two_steps = 8192, 64 * 1024 * 1024, False
    except Exception:
        pass  # unknown chip: keep the conservative defaults
    return tile_cap, vmem_limit, two_steps


def _edge_mlp_kernel(x_ref, w1_ref, b1_ref, w2_ref, b2_ref, w3_ref, b3_ref,
                     o_ref):
    """siren MLP on one column tile (feature-major layout).

    x_ref : [din,  tile_m]   transposed concat of sender/receiver/edge features
    w*_ref: [out,  in]       transposed weights; OMEGA0 pre-folded into w1/w2/b1/b2
    b*_ref: [out,  1]
    o_ref : [nout, tile_m]
    """
    h = jnp.dot(w1_ref[...], x_ref[...],
                preferred_element_type=jnp.float32) + b1_ref[...]
    h = jnp.sin(h)
    h = jnp.dot(w2_ref[...], h,
                preferred_element_type=jnp.float32) + b2_ref[...]
    h = jnp.sin(h)
    o_ref[...] = (jnp.dot(w3_ref[...], h,
                          preferred_element_type=jnp.float32) + b3_ref[...])


def _siren_mlp_pallas(x_t, prepared):
    """x_t: [din, M] f32 -> [nout, M] f32 via the row-tiled Pallas kernel."""
    w1t, b1t, w2t, b2t, w3t, b3t = prepared
    din, M = x_t.shape
    H = w2t.shape[0]
    nout = w3t.shape[0]

    tile_cap, vmem_limit, two_steps = _tpu_config()

    # Columns padded to a multiple of 128 lanes -> dense, unmasked stores.
    Mp0 = _round_up(max(M, _LANE), _LANE)
    steps = -(-Mp0 // tile_cap)
    if two_steps and Mp0 >= 1024:
        steps = max(steps, 2)          # keep both v7x TensorCores busy
    tile_m = _round_up(-(-Mp0 // steps), _LANE)
    Mp = steps * tile_m
    if Mp > M:
        x_t = jnp.pad(x_t, ((0, 0), (0, Mp - M)))

    def col_spec(rows):
        return pl.BlockSpec((rows, tile_m), lambda i: (0, i))

    def resident(a):
        # Full-extent block, constant index -> stays VMEM-resident (no re-DMA).
        return pl.BlockSpec(a.shape, lambda i: (0, 0))

    flops = 2 * Mp * (din * H + H * H + H * nout)
    transcendentals = 2 * Mp * H   # advisory: sin lowers to a VPU polynomial
    bytes_accessed = 4 * (Mp * (din + nout)
                          + (din + H + nout) * H + 2 * H + nout)

    out_t = pl.pallas_call(
        _edge_mlp_kernel,
        out_shape=jax.ShapeDtypeStruct((nout, Mp), jnp.float32),
        grid=(steps,),
        in_specs=[col_spec(din),
                  resident(w1t), resident(b1t),
                  resident(w2t), resident(b2t),
                  resident(w3t), resident(b3t)],
        out_specs=col_spec(nout),
        compiler_params=pltpu.CompilerParams(
            dimension_semantics=("parallel",),
            vmem_limit_bytes=vmem_limit),
        cost_estimate=pl.CostEstimate(
            flops=flops,
            transcendentals=transcendentals,
            bytes_accessed=bytes_accessed),
    )(x_t, w1t, b1t, w2t, b2t, w3t, b3t)

    return out_t[:, :M]


def init_edge_block_params(key, nin, nEdge, nout, hidden_dim):
    """Torch-equivalent init. Weights stored [in, out], biases [1, out]."""
    din = 2 * nin + nEdge
    k = jax.random.split(key, 6)

    # sinA (is_first=True): weight ~ U(-1/din, 1/din)
    w1 = jax.random.uniform(k[0], (din, hidden_dim), jnp.float32,
                            minval=-1.0 / din, maxval=1.0 / din)
    b1 = jax.random.uniform(k[1], (1, hidden_dim), jnp.float32,
                            minval=-1.0 / np.sqrt(din), maxval=1.0 / np.sqrt(din))

    lim2 = np.sqrt(6.0 / hidden_dim) / OMEGA0
    w2 = jax.random.uniform(k[2], (hidden_dim, hidden_dim), jnp.float32,
                            minval=-lim2, maxval=lim2)
    b2 = jax.random.uniform(k[3], (1, hidden_dim), jnp.float32,
                            minval=-1.0 / np.sqrt(hidden_dim),
                            maxval=1.0 / np.sqrt(hidden_dim))

    lim3 = np.sqrt(6.0 / hidden_dim) / OMEGA0
    w3 = jax.random.uniform(k[4], (hidden_dim, nout), jnp.float32,
                            minval=-lim3, maxval=lim3)
    b3 = jax.random.uniform(k[5], (1, nout), jnp.float32,
                            minval=-1.0 / np.sqrt(hidden_dim),
                            maxval=1.0 / np.sqrt(hidden_dim))
    return (w1, b1, w2, b2, w3, b3)


def prepare_edge_block_params(params):
    """One-time param transform to kernel layout: transpose to [out, in] and
    fold OMEGA0 into the sine layers (sin(30*(x@W+b)) == sin(x@(30W)+30b))."""
    w1, b1, w2, b2, w3, b3 = params
    return (OMEGA0 * w1.T, OMEGA0 * b1.reshape(-1, 1),
            OMEGA0 * w2.T, OMEGA0 * b2.reshape(-1, 1),
            w3.T, b3.reshape(-1, 1))


@jax.jit
def edge_block_forward(prepared_params, nodes, edges, senders, receivers):
    """Pallas-backed equivalent of edgeBlock.forward.

    nodes:     [B, N, nin]   float32
    edges:     [B, E, nEdge] float32
    senders:   [B, E, 1]     int32 indices into the N axis of nodes
    receivers: [B, E, 1]     int32 indices into the N axis of nodes
    returns    [B, E, nout]  float32
    """
    B, E, nEdge = edges.shape
    _, N, nin = nodes.shape
    nodes = nodes.astype(jnp.float32)
    edges = edges.astype(jnp.float32)

    s_idx = senders[..., 0]
    r_idx = receivers[..., 0]
    if N <= _ONE_HOT_GATHER_MAX_NODES:
        # One-hot matmul gather (XLA gather on TPU is slow). HIGHEST precision
        # makes 1.0 * value exact, so this matches take_along_axis bit-for-bit.
        oh_s = jax.nn.one_hot(s_idx, N, dtype=jnp.float32)
        oh_r = jax.nn.one_hot(r_idx, N, dtype=jnp.float32)
        s_t = jnp.einsum('ben,bnf->bfe', oh_s, nodes,
                         precision=lax.Precision.HIGHEST)    # [B, nin, E]
        r_t = jnp.einsum('ben,bnf->bfe', oh_r, nodes,
                         precision=lax.Precision.HIGHEST)
    else:
        # TODO(synk): large node tables keep the XLA gather; in-kernel fusion
        # would need per-row DMA which is not worthwhile for 16-byte rows.
        s = jnp.take_along_axis(nodes, jnp.broadcast_to(senders, (B, E, nin)),
                                axis=1)
        r = jnp.take_along_axis(nodes, jnp.broadcast_to(receivers, (B, E, nin)),
                                axis=1)
        s_t = jnp.transpose(s, (0, 2, 1))
        r_t = jnp.transpose(r, (0, 2, 1))

    e_t = jnp.transpose(edges, (0, 2, 1))                     # [B, nEdge, E]
    x_t = jnp.concatenate([s_t, r_t, e_t], axis=1)            # [B, din, E]
    din = x_t.shape[1]
    x_t = jnp.transpose(x_t, (1, 0, 2)).reshape(din, B * E)   # [din, B*E]

    out_t = _siren_mlp_pallas(x_t, prepared_params)           # [nout, B*E]
    nout = out_t.shape[0]
    return jnp.transpose(out_t.reshape(nout, B, E), (1, 2, 0))


def _reference_forward(params, nodes, edges, senders, receivers):
    """Pure-JAX reference (matches the PyTorch forward exactly)."""
    w1, b1, w2, b2, w3, b3 = params
    B, E, _ = edges.shape
    nin = nodes.shape[-1]
    s = jnp.take_along_axis(nodes, jnp.broadcast_to(senders, (B, E, nin)), axis=1)
    r = jnp.take_along_axis(nodes, jnp.broadcast_to(receivers, (B, E, nin)), axis=1)
    x = jnp.concatenate((s, r, edges), axis=-1)
    h = jnp.sin(OMEGA0 * (x @ w1 + b1[0]))
    h = jnp.sin(OMEGA0 * (h @ w2 + b2[0]))
    return h @ w3 + b3[0]


if __name__ == "__main__":
    # Small shapes consistent with the module's forward.
    B, N, E = 2, 16, 8
    nin, nEdge, nout, hidden = 4, 3, 4, 32

    key = jax.random.PRNGKey(0)
    k_nodes, k_edges, k_s, k_r, k_params = jax.random.split(key, 5)

    nodes = jax.random.normal(k_nodes, (B, N, nin), dtype=jnp.float32)
    edges = jax.random.normal(k_edges, (B, E, nEdge), dtype=jnp.float32)
    senders = jax.random.randint(k_s, (B, E, 1), 0, N, dtype=jnp.int32)
    receivers = jax.random.randint(k_r, (B, E, 1), 0, N, dtype=jnp.int32)

    params = init_edge_block_params(k_params, nin, nEdge, nout, hidden)
    prepared = prepare_edge_block_params(params)   # one-time transform, not per call

    out = edge_block_forward(prepared, nodes, edges, senders, receivers)
    out = jax.block_until_ready(out)

    ref = _reference_forward(params, nodes, edges, senders, receivers)
    np.testing.assert_allclose(np.asarray(out), np.asarray(ref),
                               rtol=2e-5, atol=2e-5)

    assert out.shape == (B, E, nout)
    print("KERNEL_OK")
</pallas_src>

<mosaic_0001>
module attributes {stable_mosaic.version = 11 : i64} {
  func.func @_edge_mlp_kernel(%arg0: i32, %arg1: memref<11x128xf32, #tpu.memory_space<vmem>>, %arg2: memref<32x11xf32, #tpu.memory_space<vmem>>, %arg3: memref<32x1xf32, #tpu.memory_space<vmem>>, %arg4: memref<32x32xf32, #tpu.memory_space<vmem>>, %arg5: memref<32x1xf32, #tpu.memory_space<vmem>>, %arg6: memref<4x32xf32, #tpu.memory_space<vmem>>, %arg7: memref<4x1xf32, #tpu.memory_space<vmem>>, %arg8: memref<4x128xf32, #tpu.memory_space<vmem>>) attributes {dimension_semantics = [#tpu.dimension_semantics<parallel>], iteration_bounds = array<i64: 1>, scalar_prefetch = 0 : i64, scratch_operands = 0 : i64, tpu.core_type = #tpu.core_type<tc>, window_params = [{transform_indices = @transform_0, window_bounds = array<i64: 11, 128>}, {pipeline_mode = #tpu.pipeline_mode<synchronous>, transform_indices = @transform_1, window_bounds = array<i64: 32, 11>}, {pipeline_mode = #tpu.pipeline_mode<synchronous>, transform_indices = @transform_2, window_bounds = array<i64: 32, 1>}, {pipeline_mode = #tpu.pipeline_mode<synchronous>, transform_indices = @transform_3, window_bounds = array<i64: 32, 32>}, {pipeline_mode = #tpu.pipeline_mode<synchronous>, transform_indices = @transform_4, window_bounds = array<i64: 32, 1>}, {pipeline_mode = #tpu.pipeline_mode<synchronous>, transform_indices = @transform_5, window_bounds = array<i64: 4, 32>}, {pipeline_mode = #tpu.pipeline_mode<synchronous>, transform_indices = @transform_6, window_bounds = array<i64: 4, 1>}, {transform_indices = @transform_7, window_bounds = array<i64: 4, 128>}]} {
    %c0 = arith.constant 0 : index
    %c0_0 = arith.constant 0 : index
    %0 = vector.load %arg2[%c0, %c0_0] : memref<32x11xf32, #tpu.memory_space<vmem>>, vector<32x11xf32>
    %c0_1 = arith.constant 0 : index
    %c0_2 = arith.constant 0 : index
    %1 = vector.load %arg1[%c0_1, %c0_2] : memref<11x128xf32, #tpu.memory_space<vmem>>, vector<11x128xf32>
    %cst = arith.constant dense<0.000000e+00> : vector<32x128xf32>
    %2 = tpu.matmul %0, %1, %cst {dimension_numbers = #tpu.dot_dimension_numbers<[1], [0], [0], [1], [0, 0, 1, 1], [], []>} : vector<32x11xf32>, vector<11x128xf32>, vector<32x128xf32> -> vector<32x128xf32>
    %c0_3 = arith.constant 0 : index
    %c0_4 = arith.constant 0 : index
    %3 = vector.load %arg3[%c0_3, %c0_4] : memref<32x1xf32, #tpu.memory_space<vmem>>, vector<32x1xf32>
    %4 = vector.broadcast %3 : vector<32x1xf32> to vector<32x128xf32>
    %5 = arith.addf %2, %4 : vector<32x128xf32>
    %6 = math.sin %5 : vector<32x128xf32>
    %c0_5 = arith.constant 0 : index
    %c0_6 = arith.constant 0 : index
    %7 = vector.load %arg4[%c0_5, %c0_6] : memref<32x32xf32, #tpu.memory_space<vmem>>, vector<32x32xf32>
    %cst_7 = arith.constant dense<0.000000e+00> : vector<32x128xf32>
    %8 = tpu.matmul %7, %6, %cst_7 {dimension_numbers = #tpu.dot_dimension_numbers<[1], [0], [0], [1], [0, 0, 1, 1], [], []>} : vector<32x32xf32>, vector<32x128xf32>, vector<32x128xf32> -> vector<32x128xf32>
    %c0_8 = arith.constant 0 : index
    %c0_9 = arith.constant 0 : index
    %9 = vector.load %arg5[%c0_8, %c0_9] : memref<32x1xf32, #tpu.memory_space<vmem>>, vector<32x1xf32>
    %10 = vector.broadcast %9 : vector<32x1xf32> to vector<32x128xf32>
    %11 = arith.addf %8, %10 : vector<32x128xf32>
    %12 = math.sin %11 : vector<32x128xf32>
    %c0_10 = arith.constant 0 : index
    %c0_11 = arith.constant 0 : index
    %13 = vector.load %arg6[%c0_10, %c0_11] : memref<4x32xf32, #tpu.memory_space<vmem>>, vector<4x32xf32>
    %cst_12 = arith.constant dense<0.000000e+00> : vector<4x128xf32>
    %14 = tpu.matmul %13, %12, %cst_12 {dimension_numbers = #tpu.dot_dimension_numbers<[1], [0], [0], [1], [0, 0, 1, 1], [], []>} : vector<4x32xf32>, vector<32x128xf32>, vector<4x128xf32> -> vector<4x128xf32>
    %c0_13 = arith.constant 0 : index
    %c0_14 = arith.constant 0 : index
    %15 = vector.load %arg7[%c0_13, %c0_14] : memref<4x1xf32, #tpu.memory_space<vmem>>, vector<4x1xf32>
    %16 = vector.broadcast %15 : vector<4x1xf32> to vector<4x128xf32>
    %17 = arith.addf %14, %16 : vector<4x128xf32>
    %c0_15 = arith.constant 0 : index
    %c0_16 = arith.constant 0 : index
    %18 = vector.load %arg8[%c0_15, %c0_16] : memref<4x128xf32, #tpu.memory_space<vmem>>, vector<4x128xf32>
    tpu.vector_store %arg8[%c0_15, %c0_16], %17 {strides = array<i32>} : memref<4x128xf32, #tpu.memory_space<vmem>>, vector<4x128xf32>,
    return
  }
  func.func @transform_0(%arg0: i32) -> (i32, i32) {
    %c0_i32 = arith.constant 0 : i32
    %c0_i32_0 = arith.constant 0 : i32
    return %c0_i32, %arg0 : i32, i32
  }
  func.func @transform_1(%arg0: i32) -> (i32, i32) {
    %c0_i32 = arith.constant 0 : i32
    %c0_i32_0 = arith.constant 0 : i32
    %c0_i32_1 = arith.constant 0 : i32
    return %c0_i32, %c0_i32_0 : i32, i32
  }
  func.func @transform_2(%arg0: i32) -> (i32, i32) {
    %c0_i32 = arith.constant 0 : i32
    %c0_i32_0 = arith.constant 0 : i32
    %c0_i32_1 = arith.constant 0 : i32
    return %c0_i32, %c0_i32_0 : i32, i32
  }
  func.func @transform_3(%arg0: i32) -> (i32, i32) {
    %c0_i32 = arith.constant 0 : i32
    %c0_i32_0 = arith.constant 0 : i32
    %c0_i32_1 = arith.constant 0 : i32
    return %c0_i32, %c0_i32_0 : i32, i32
  }
  func.func @transform_4(%arg0: i32) -> (i32, i32) {
    %c0_i32 = arith.constant 0 : i32
    %c0_i32_0 = arith.constant 0 : i32
    %c0_i32_1 = arith.constant 0 : i32
    return %c0_i32, %c0_i32_0 : i32, i32
  }
  func.func @transform_5(%arg0: i32) -> (i32, i32) {
    %c0_i32 = arith.constant 0 : i32
    %c0_i32_0 = arith.constant 0 : i32
    %c0_i32_1 = arith.constant 0 : i32
    return %c0_i32, %c0_i32_0 : i32, i32
  }
  func.func @transform_6(%arg0: i32) -> (i32, i32) {
    %c0_i32 = arith.constant 0 : i32
    %c0_i32_0 = arith.constant 0 : i32
    %c0_i32_1 = arith.constant 0 : i32
    return %c0_i32, %c0_i32_0 : i32, i32
  }
  func.func @transform_7(%arg0: i32) -> (i32, i32) {
    %c0_i32 = arith.constant 0 : i32
    %c0_i32_0 = arith.constant 0 : i32
    return %c0_i32, %arg0 : i32, i32
  }
}

</mosaic_0001>

<llo_original>
// kernel: edge_block_forward.1
$region0: #{edge_block_forward.1}
  #allocation0 [shape = 'u32[]', space=smem, size = 0x4, offset = 0x4, fixed_abs, tag = 'smem constant byte address 0x4 - core index']
  #allocation1 [shape = 'u32[144,128]{1,0:T(1,128)}', space=vmem, size = 0x12000, scoped, tag = 'internal scratch']
  %s0 = inlined_call_operand.vmem [shape: f32[11,128], index: 0, kind: input, shape index: {}]
  %s1 = inlined_call_operand.vmem [shape: f32[32,11], index: 1, kind: input, shape index: {}]
  %s2 = inlined_call_operand.vmem [shape: f32[32,1], index: 2, kind: input, shape index: {}]
  %s3 = inlined_call_operand.vmem [shape: f32[32,32], index: 3, kind: input, shape index: {}]
  %s4 = inlined_call_operand.vmem [shape: f32[32,1], index: 4, kind: input, shape index: {}]
  %s5 = inlined_call_operand.vmem [shape: f32[4,32], index: 5, kind: input, shape index: {}]
  %s6 = inlined_call_operand.vmem [shape: f32[4,1], index: 6, kind: input, shape index: {}]
  %s7 = inlined_call_operand.vmem [shape: f32[4,128], index: 7, kind: output, shape index: {}]
  %s8 = sld [smem:[#allocation0]]
  $region38: #{edge_block_forward.1} parent=0
    _
  %s10 = ssub.s32 1, %s8
  %s11 = scalar_select 0, %s10, %s8
  // Predicated region
  $region2: #{edge_block_forward.1} parent=0 // pred_check
    _
  $region3: #{edge_block_forward.1} parent=0 // pred_check_branch
    %13 = sbr.rel (0) target = $region5
  $region4: #{edge_block_forward.1} parent=0 // pred_region
    _
  $region5: #{edge_block_forward.1} parent=0 // pred_fallthru
    _
  // Predicated region
  $region6: #{edge_block_forward.1} parent=0 // pred_check
    _
  $region7: #{edge_block_forward.1} parent=0 // pred_check_branch
    %15 = sbr.rel (0) target = $region9
  $region8: #{edge_block_forward.1} parent=0 // pred_region
    _
  $region9: #{edge_block_forward.1} parent=0 // pred_fallthru
    _
  // Predicated region
  $region10: #{edge_block_forward.1} parent=0 // pred_check
    _
  $region11: #{edge_block_forward.1} parent=0 // pred_check_branch
    %17 = sbr.rel (0) target = $region13
  $region12: #{edge_block_forward.1} parent=0 // pred_region
    _
  $region13: #{edge_block_forward.1} parent=0 // pred_fallthru
    _
  // Predicated region
  $region14: #{edge_block_forward.1} parent=0 // pred_check
    _
  $region15: #{edge_block_forward.1} parent=0 // pred_check_branch
    %19 = sbr.rel (0) target = $region17
  $region16: #{edge_block_forward.1} parent=0 // pred_region
    _
  $region17: #{edge_block_forward.1} parent=0 // pred_fallthru
    _
  // Predicated region
  $region18: #{edge_block_forward.1} parent=0 // pred_check
    _
  $region19: #{edge_block_forward.1} parent=0 // pred_check_branch
    %21 = sbr.rel (0) target = $region21
  $region20: #{edge_block_forward.1} parent=0 // pred_region
    _
  $region21: #{edge_block_forward.1} parent=0 // pred_fallthru
    _
  // Predicated region
  $region22: #{edge_block_forward.1} parent=0 // pred_check
    _
  $region23: #{edge_block_forward.1} parent=0 // pred_check_branch
    %23 = sbr.rel (0) target = $region25
  $region24: #{edge_block_forward.1} parent=0 // pred_region
    _
  $region25: #{edge_block_forward.1} parent=0 // pred_fallthru
    _
  // Predicated region
  $region26: #{edge_block_forward.1} parent=0 // pred_check
    _
  $region27: #{edge_block_forward.1} parent=0 // pred_check_branch
    %25 = sbr.rel (0) target = $region29
  $region28: #{edge_block_forward.1} parent=0 // pred_region
    _
  $region29: #{edge_block_forward.1} parent=0 // pred_fallthru
    _
  %v26 = vld [vmem:[%s1] sm:$0xff]
  %v27 = vld [vmem:[%s1 + $0x8] sm:$0xff]
  %v28 = vld [vmem:[%s1 + $0x10] sm:$0xff]
  %v29 = vld [vmem:[%s1 + $0x18] sm:$0xff]
  %v30 = vld [vmem:[%s0] sm:$0xff]
  %v31 = vld [vmem:[%s0 + $0x8] sm:$0x7]
  %v32 = vld [vmem:[%s2] sm:$0xff]
  %v33 = vld [vmem:[%s2 + $0x8] sm:$0xff]
  %v34 = vld [vmem:[%s2 + $0x10] sm:$0xff]
  %v35 = vld [vmem:[%s2 + $0x18] sm:$0xff]
  %37 = vset.pattern.permute.xlu0 0
  %38 = vperm.xlu0 %37, %v32
  %v39 = vpop.permute.xlu0 %38
  %42 = vset.pattern.permute.xlu0 0
  %43 = vperm.xlu0 %42, %v33
  %v44 = vpop.permute.xlu0 %43
  %47 = vset.pattern.permute.xlu0 0
  %48 = vperm.xlu0 %47, %v34
  %v49 = vpop.permute.xlu0 %48
  %52 = vset.pattern.permute.xlu0 0
  %53 = vperm.xlu0 %52, %v35
  %v54 = vpop.permute.xlu0 %53
  %vm56 = vcmask 89088
  %v58 = vsel %vm56, %v26, 0
  %v61 = vsel %vm56, %v27, 0
  %v64 = vsel %vm56, %v28, 0
  %v67 = vsel %vm56, %v29, 0
  %vm69 = vcmask 1042432
  %v71 = vsel %vm69, %v31, 0
  %73 = vmatprep.subr.mxu0 0.0
  %74 = vmatpush1.msra.mxu0 %v30
  %75 = vmatprep.subr.mxu0 0.0
  %76 = vmatpush1.msra.mxu0 %v71
  %77 = vmatprep.subr.mxu0 0.0
  %78 = vmatpush1.msra.mxu0 0.0
  %79 = vmatprep.subr.mxu0 0.0
  %80 = vmatpush1.msra.mxu0 0.0
  %81 = vmatprep.subr.mxu0 0.0
  %82 = vmatpush1.msra.mxu0 0.0
  %83 = vmatprep.subr.mxu0 0.0
  %84 = vmatpush1.msra.mxu0 0.0
  %85 = vmatprep.subr.mxu0 0.0
  %86 = vmatpush1.msra.mxu0 0.0
  %87 = vmatprep.subr.mxu0 0.0
  %88 = vmatpush1.msra.mxu0 0.0
  %89 = vmatprep.subr.mxu0 0.0
  %90 = vmatpush1.msra.mxu0 0.0
  %91 = vmatprep.subr.mxu0 0.0
  %92 = vmatpush1.msra.mxu0 0.0
  %93 = vmatprep.subr.mxu0 0.0
  %94 = vmatpush1.msra.mxu0 0.0
  %95 = vmatprep.subr.mxu0 0.0
  %96 = vmatpush1.msra.mxu0 0.0
  %97 = vmatprep.subr.mxu0 0.0
  %98 = vmatpush1.msra.mxu0 0.0
  %99 = vmatprep.subr.mxu0 0.0
  %100 = vmatpush1.msra.mxu0 0.0
  %101 = vmatprep.subr.mxu0 0.0
  %102 = vmatpush1.msra.mxu0 0.0
  %103 = vmatprep.subr.mxu0 0.0
  %104 = vmatpush1.msra.mxu0 0.0
  %105 = vmatprep.subr.mxu0 0.0
  %106 = vmatpush1.msra.mxu0 0.0
  %107 = vmatprep.subr.mxu0 0.0
  %108 = vmatpush1.msra.mxu0 0.0
  %109 = vmatprep.subr.mxu0 0.0
  %110 = vmatpush1.msra.mxu0 0.0
  %111 = vmatprep.subr.mxu0 0.0
  %112 = vmatpush1.msra.mxu0 0.0
  %113 = vmatprep.subr.mxu0 0.0
  %114 = vmatpush1.msra.mxu0 0.0
  %115 = vmatprep.subr.mxu0 0.0
  %116 = vmatpush1.msra.mxu0 0.0
  %117 = vmatprep.subr.mxu0 0.0
  %118 = vmatpush1.msra.mxu0 0.0
  %119 = vmatprep.subr.mxu0 0.0
  %120 = vmatpush1.msra.mxu0 0.0
  %121 = vmatprep.subr.mxu0 0.0
  %122 = vmatpush1.msra.mxu0 0.0
  %123 = vmatprep.subr.mxu0 0.0
  %124 = vmatpush1.msra.mxu0 0.0
  %125 = vmatprep.subr.mxu0 0.0
  %126 = vmatpush1.msra.mxu0 0.0
  %127 = vmatprep.subr.mxu0 0.0
  %128 = vmatpush1.msra.mxu0 0.0
  %129 = vmatprep.subr.mxu0 0.0
  %130 = vmatpush1.msra.mxu0 0.0
  %131 = vmatprep.subr.mxu0 0.0
  %132 = vmatpush1.msra.mxu0 0.0
  %133 = vmatprep.subr.mxu0 0.0
  %134 = vmatpush1.msra.mxu0 0.0
  %135 = vmatprep.subr.mxu0 0.0
  %136 = vmatpush1.msra.mxu0 0.0
  %137 = vmatprep.mubr.f32.mxu0 0.0
  %138 = vmatmul.mubr.f32.gmra.mrb[0].mxu0 %v58
  %v139 = vpop.f32.mrb[0].mxu0
  %v140 = vadd.f32 %v39, %v139
  %v141 = vpop.f32.mrb[0].mxu0
  %142 = vmatprep.mubr.f32.mxu0 0.0
  %143 = vmatmul.mubr.f32.gmra.mrb[0].mxu0 %v61
  %v144 = vpop.f32.mrb[0].mxu0
  %v145 = vadd.f32 %v44, %v144
  %v146 = vpop.f32.mrb[0].mxu0
  %147 = vmatprep.mubr.f32.mxu0 0.0
  %148 = vmatmul.mubr.f32.gmra.mrb[0].mxu0 %v64
  %v149 = vpop.f32.mrb[0].mxu0
  %v150 = vadd.f32 %v49, %v149
  %v151 = vpop.f32.mrb[0].mxu0
  %152 = vmatprep.mubr.f32.mxu0 0.0
  %153 = vmatmul.mubr.f32.gmra.mrb[0].mxu0 %v67
  %v154 = vpop.f32.mrb[0].mxu0
  %v155 = vadd.f32 %v54, %v154
  %v156 = vpop.f32.mrb[0].mxu0
  %157 = vdwg.mxu0
  %v158 = vand.u32 2147483647, %v140
  %vm159 = vcmp.le.f32.partialorder %v158, 0.7853982
  %vm160 = vcmp.lt.s32.totalorder %v140, 0
  %v161 = vand.u32 %v140, 2139095040
  %v162 = vshrl.u32 %v161, 23
  %v163 = vsub.s32 %v162, 127
  %v164 = vand.u32 2147483647, %v140
  %v165 = vand.u32 %v164, 8388607
  %v166 = vor.u32 %v165, 8388608
  %v167 = vsub.s32 0, %v166
  %v168 = vadd.s32 %v163, 1
  %vm169 = vcmp.gt.s32.totalorder %v168, 0
  %v170 = vsel %vm169, %v168, 0
  %v171 = vshrl.u32 %v170, 5
  %v172 = vand.u32 %v170, 31
  %v173 = vsub.s32 32, %v172
  %v174 = vshrl.u32 683565275, %v173
  %v175 = vshll.u32 683565275, %v172
  %v176 = vshrl.u32 2475754826, %v173
  %v177 = vor.u32 %v175, %v176
  %v178 = vshll.u32 2475754826, %v172
  %v179 = vshrl.u32 2131351028, %v173
  %v180 = vor.u32 %v178, %v179
  %v181 = vshll.u32 2131351028, %v172
  %v182 = vshrl.u32 2102212464, %v173
  %v183 = vor.u32 %v181, %v182
  %v184 = vshll.u32 2102212464, %v172
  %v185 = vshrl.u32 920167782, %v173
  %v186 = vor.u32 %v184, %v185
  %v187 = vshll.u32 920167782, %v172
  %v188 = vshrl.u32 1326507024, %v173
  %v189 = vor.u32 %v187, %v188
  %vm190 = vcmp.lt.s32.totalorder %v171, 1
  %vm191 = vcmp.lt.s32.totalorder %v171, 2
  %vm192 = vcmp.lt.s32.totalorder %v171, 3
  %vm193 = vcmp.lt.s32.totalorder %v171, 4
  %v194 = vsel %vm190, %v174, %v177
  %v195 = vsel %vm193, %v183, 2102212464
  %v196 = vsel %vm192, %v180, %v195
  %v197 = vsel %vm191, %v194, %v196
  %v198 = vsel %vm190, %v177, %v180
  %v199 = vsel %vm193, %v186, 920167782
  %v200 = vsel %vm192, %v183, %v199
  %v201 = vsel %vm191, %v198, %v200
  %v202 = vsel %vm190, %v180, %v183
  %v203 = vsel %vm193, %v189, 1326507024
  %v204 = vsel %vm192, %v186, %v203
  %v205 = vsel %vm191, %v202, %v204
  %v206 = vshll.u32 %v166, 8
  %v207 = vmul.u32.u64.compose %v206, %v205
  %v208 = vextract.low.u32 %v207
  %v209 = vextract.high.u32 %v207
  %v210 = vmul.u32.u64.compose %v206, %v201
  %v211 = vextract.low.u32 %v210
  %v212 = vextract.high.u32 %v210
  %v213 = vmul.u32 %v206, %v197
  %v214 = vadd.s32 %v209, %v211
  %vm215 = vc.u32 %v209, %v211
  %v216 = vadd.s32 %v212, 1
  %v217 = vsel %vm215, %v216, %v212
  %v218 = vadd.s32 %v213, %v217
  %v219 = vadd.s32 %v218, 536870912
  %v220 = vshrl.u32 %v219, 30
  %v221 = vshll.u32 %v220, 30
  %v222 = vsub.s32 %v218, %v221
  %vm223 = vcmp.lt.s32.totalorder %v222, 0
  %v224 = vsub.s32 0, %v222
  %v225 = vsel %vm223, %v224, %v222
  %v226 = vclz %v225
  %v227 = vsub.s32 %v226, 2
  %vm228 = vcmp.gt.s32.totalorder 0, %v227
  %v229 = vsel %vm228, 0, %v227
  %v230 = vsub.s32 32, %v229
  %v231 = vshll.u32 %v222, %v229
  %v232 = vshrl.u32 %v214, %v230
  %v233 = vor.u32 %v231, %v232
  %v234 = vsub.s32 4294967266, %v229
  %v235 = vadd.s32 %v234, 127
  %v236 = vshll.u32 %v235, 23
  %v237 = vor.u32 4788187, %v236
  %v238 = vand.u32 2147483647, %v237
  %v240 = vcvt.s32.f32 %v233
  %v241 = vmul.f32 %v240, %v238
  %v242 = vxor.u32 %v241, 2147483648
  %v243 = vsel %vm160, %v242, %v241
  %v244 = vsub.s32 4, %v220
  %v245 = vsel %vm160, %v244, %v220
  %v246 = vsel %vm159, %v140, %v243
  %v247 = vsel %vm159, 0, %v245
  %v248 = vcosq.f32.pop %v246
  %v249 = vsinq.f32.pop %v246
  %vm250 = vweird.f32 %v140
  %v251 = vadd.s32 %v247, 3
  %v252 = vand.u32 %v251, 3
  %vm253 = vcmp.lt.s32.totalorder %v252, 2
  %vm254 = vcmp.eq.s32.totalorder %v252, 0
  %v255 = vxor.u32 %v249, 2147483648
  %v256 = vsel %vm254, %v248, %v255
  %vm257 = vcmp.eq.s32.totalorder %v252, 2
  %v258 = vxor.u32 %v248, 2147483648
  %v259 = vsel %vm257, %v258, %v249
  %v260 = vsel %vm253, %v256, %v259
  %v261 = vsel %vm250, nan, %v260
  %v262 = vand.u32 2147483647, %v145
  %vm263 = vcmp.le.f32.partialorder %v262, 0.7853982
  %vm264 = vcmp.lt.s32.totalorder %v145, 0
  %v265 = vand.u32 %v145, 2139095040
  %v266 = vshrl.u32 %v265, 23
  %v267 = vsub.s32 %v266, 127
  %v268 = vand.u32 2147483647, %v145
  %v269 = vand.u32 %v268, 8388607
  %v270 = vor.u32 %v269, 8388608
  %v271 = vsub.s32 0, %v270
  %v272 = vadd.s32 %v267, 1
  %vm273 = vcmp.gt.s32.totalorder %v272, 0
  %v274 = vsel %vm273, %v272, 0
  %v275 = vshrl.u32 %v274, 5
  %v276 = vand.u32 %v274, 31
  %v277 = vsub.s32 32, %v276
  %v278 = vshrl.u32 683565275, %v277
  %v279 = vshll.u32 683565275, %v276
  %v280 = vshrl.u32 2475754826, %v277
  %v281 = vor.u32 %v279, %v280
  %v282 = vshll.u32 2475754826, %v276
  %v283 = vshrl.u32 2131351028, %v277
  %v284 = vor.u32 %v282, %v283
  %v285 = vshll.u32 2131351028, %v276
  %v286 = vshrl.u32 2102212464, %v277
  %v287 = vor.u32 %v285, %v286
  %v288 = vshll.u32 2102212464, %v276
  %v289 = vshrl.u32 920167782, %v277
  %v290 = vor.u32 %v288, %v289
  %v291 = vshll.u32 920167782, %v276
  %v292 = vshrl.u32 1326507024, %v277
  %v293 = vor.u32 %v291, %v292
  %vm294 = vcmp.lt.s32.totalorder %v275, 1
  %vm295 = vcmp.lt.s32.totalorder %v275, 2
  %vm296 = vcmp.lt.s32.totalorder %v275, 3
  %vm297 = vcmp.lt.s32.totalorder %v275, 4
  %v298 = vsel %vm294, %v278, %v281
  %v299 = vsel %vm297, %v287, 2102212464
  %v300 = vsel %vm296, %v284, %v299
  %v301 = vsel %vm295, %v298, %v300
  %v302 = vsel %vm294, %v281, %v284
  %v303 = vsel %vm297, %v290, 920167782
  %v304 = vsel %vm296, %v287, %v303
  %v305 = vsel %vm295, %v302, %v304
  %v306 = vsel %vm294, %v284, %v287
  %v307 = vsel %vm297, %v293, 1326507024
  %v308 = vsel %vm296, %v290, %v307
  %v309 = vsel %vm295, %v306, %v308
  %v310 = vshll.u32 %v270, 8
  %v311 = vmul.u32.u64.compose %v310, %v309
  %v312 = vextract.low.u32 %v311
  %v313 = vextract.high.u32 %v311
  %v314 = vmul.u32.u64.compose %v310, %v305
  %v315 = vextract.low.u32 %v314
  %v316 = vextract.high.u32 %v314
  %v317 = vmul.u32 %v310, %v301
  %v318 = vadd.s32 %v313, %v315
  %vm319 = vc.u32 %v313, %v315
  %v320 = vadd.s32 %v316, 1
  %v321 = vsel %vm319, %v320, %v316
  %v322 = vadd.s32 %v317, %v321
  %v323 = vadd.s32 %v322, 536870912
  %v324 = vshrl.u32 %v323, 30
  %v325 = vshll.u32 %v324, 30
  %v326 = vsub.s32 %v322, %v325
  %vm327 = vcmp.lt.s32.totalorder %v326, 0
  %v328 = vsub.s32 0, %v326
  %v329 = vsel %vm327, %v328, %v326
  %v330 = vclz %v329
  %v331 = vsub.s32 %v330, 2
  %vm332 = vcmp.gt.s32.totalorder 0, %v331
  %v333 = vsel %vm332, 0, %v331
  %v334 = vsub.s32 32, %v333
  %v335 = vshll.u32 %v326, %v333
  %v336 = vshrl.u32 %v318, %v334
  %v337 = vor.u32 %v335, %v336
  %v338 = vsub.s32 4294967266, %v333
  %v339 = vadd.s32 %v338, 127
  %v340 = vshll.u32 %v339, 23
  %v341 = vor.u32 4788187, %v340
  %v342 = vand.u32 2147483647, %v341
  %v344 = vcvt.s32.f32 %v337
  %v345 = vmul.f32 %v344, %v342
  %v346 = vxor.u32 %v345, 2147483648
  %v347 = vsel %vm264, %v346, %v345
  %v348 = vsub.s32 4, %v324
  %v349 = vsel %vm264, %v348, %v324
  %v350 = vsel %vm263, %v145, %v347
  %v351 = vsel %vm263, 0, %v349
  %v352 = vcosq.f32.pop %v350
  %v353 = vsinq.f32.pop %v350
  %vm354 = vweird.f32 %v145
  %v355 = vadd.s32 %v351, 3
  %v356 = vand.u32 %v355, 3
  %vm357 = vcmp.lt.s32.totalorder %v356, 2
  %vm358 = vcmp.eq.s32.totalorder %v356, 0
  %v359 = vxor.u32 %v353, 2147483648
  %v360 = vsel %vm358, %v352, %v359
  %vm361 = vcmp.eq.s32.totalorder %v356, 2
  %v362 = vxor.u32 %v352, 2147483648
  %v363 = vsel %vm361, %v362, %v353
  %v364 = vsel %vm357, %v360, %v363
  %v365 = vsel %vm354, nan, %v364
  %v366 = vand.u32 2147483647, %v150
  %vm367 = vcmp.le.f32.partialorder %v366, 0.7853982
  %vm368 = vcmp.lt.s32.totalorder %v150, 0
  %v369 = vand.u32 %v150, 2139095040
  %v370 = vshrl.u32 %v369, 23
  %v371 = vsub.s32 %v370, 127
  %v372 = vand.u32 2147483647, %v150
  %v373 = vand.u32 %v372, 8388607
  %v374 = vor.u32 %v373, 8388608
  %v375 = vsub.s32 0, %v374
  %v376 = vadd.s32 %v371, 1
  %vm377 = vcmp.gt.s32.totalorder %v376, 0
  %v378 = vsel %vm377, %v376, 0
  %v379 = vshrl.u32 %v378, 5
  %v380 = vand.u32 %v378, 31
  %v381 = vsub.s32 32, %v380
  %v382 = vshrl.u32 683565275, %v381
  %v383 = vshll.u32 683565275, %v380
  %v384 = vshrl.u32 2475754826, %v381
  %v385 = vor.u32 %v383, %v384
  %v386 = vshll.u32 2475754826, %v380
  %v387 = vshrl.u32 2131351028, %v381
  %v388 = vor.u32 %v386, %v387
  %v389 = vshll.u32 2131351028, %v380
  %v390 = vshrl.u32 2102212464, %v381
  %v391 = vor.u32 %v389, %v390
  %v392 = vshll.u32 2102212464, %v380
  %v393 = vshrl.u32 920167782, %v381
  %v394 = vor.u32 %v392, %v393
  %v395 = vshll.u32 920167782, %v380
  %v396 = vshrl.u32 1326507024, %v381
  %v397 = vor.u32 %v395, %v396
  %vm398 = vcmp.lt.s32.totalorder %v379, 1
  %vm399 = vcmp.lt.s32.totalorder %v379, 2
  %vm400 = vcmp.lt.s32.totalorder %v379, 3
  %vm401 = vcmp.lt.s32.totalorder %v379, 4
  %v402 = vsel %vm398, %v382, %v385
  %v403 = vsel %vm401, %v391, 2102212464
  %v404 = vsel %vm400, %v388, %v403
  %v405 = vsel %vm399, %v402, %v404
  %v406 = vsel %vm398, %v385, %v388
  %v407 = vsel %vm401, %v394, 920167782
  %v408 = vsel %vm400, %v391, %v407
  %v409 = vsel %vm399, %v406, %v408
  %v410 = vsel %vm398, %v388, %v391
  %v411 = vsel %vm401, %v397, 1326507024
  %v412 = vsel %vm400, %v394, %v411
  %v413 = vsel %vm399, %v410, %v412
  %v414 = vshll.u32 %v374, 8
  %v415 = vmul.u32.u64.compose %v414, %v413
  %v416 = vextract.low.u32 %v415
  %v417 = vextract.high.u32 %v415
  %v418 = vmul.u32.u64.compose %v414, %v409
  %v419 = vextract.low.u32 %v418
  %v420 = vextract.high.u32 %v418
  %v421 = vmul.u32 %v414, %v405
  %v422 = vadd.s32 %v417, %v419
  %vm423 = vc.u32 %v417, %v419
  %v424 = vadd.s32 %v420, 1
  %v425 = vsel %vm423, %v424, %v420
  %v426 = vadd.s32 %v421, %v425
  %v427 = vadd.s32 %v426, 536870912
  %v428 = vshrl.u32 %v427, 30
  %v429 = vshll.u32 %v428, 30
  %v430 = vsub.s32 %v426, %v429
  %vm431 = vcmp.lt.s32.totalorder %v430, 0
  %v432 = vsub.s32 0, %v430
  %v433 = vsel %vm431, %v432, %v430
  %v434 = vclz %v433
  %v435 = vsub.s32 %v434, 2
  %vm436 = vcmp.gt.s32.totalorder 0, %v435
  %v437 = vsel %vm436, 0, %v435
  %v438 = vsub.s32 32, %v437
  %v439 = vshll.u32 %v430, %v437
  %v440 = vshrl.u32 %v422, %v438
  %v441 = vor.u32 %v439, %v440
  %v442 = vsub.s32 4294967266, %v437
  %v443 = vadd.s32 %v442, 127
  %v444 = vshll.u32 %v443, 23
  %v445 = vor.u32 4788187, %v444
  %v446 = vand.u32 2147483647, %v445
  %v448 = vcvt.s32.f32 %v441
  %v449 = vmul.f32 %v448, %v446
  %v450 = vxor.u32 %v449, 2147483648
  %v451 = vsel %vm368, %v450, %v449
  %v452 = vsub.s32 4, %v428
  %v453 = vsel %vm368, %v452, %v428
  %v454 = vsel %vm367, %v150, %v451
  %v455 = vsel %vm367, 0, %v453
  %v456 = vcosq.f32.pop %v454
  %v457 = vsinq.f32.pop %v454
  %vm458 = vweird.f32 %v150
  %v459 = vadd.s32 %v455, 3
  %v460 = vand.u32 %v459, 3
  %vm461 = vcmp.lt.s32.totalorder %v460, 2
  %vm462 = vcmp.eq.s32.totalorder %v460, 0
  %v463 = vxor.u32 %v457, 2147483648
  %v464 = vsel %vm462, %v456, %v463
  %vm465 = vcmp.eq.s32.totalorder %v460, 2
  %v466 = vxor.u32 %v456, 2147483648
  %v467 = vsel %vm465, %v466, %v457
  %v468 = vsel %vm461, %v464, %v467
  %v469 = vsel %vm458, nan, %v468
  %v470 = vand.u32 2147483647, %v155
  %vm471 = vcmp.le.f32.partialorder %v470, 0.7853982
  %vm472 = vcmp.lt.s32.totalorder %v155, 0
  %v473 = vand.u32 %v155, 2139095040
  %v474 = vshrl.u32 %v473, 23
  %v475 = vsub.s32 %v474, 127
  %v476 = vand.u32 2147483647, %v155
  %v477 = vand.u32 %v476, 8388607
  %v478 = vor.u32 %v477, 8388608
  %v479 = vsub.s32 0, %v478
  %v480 = vadd.s32 %v475, 1
  %vm481 = vcmp.gt.s32.totalorder %v480, 0
  %v482 = vsel %vm481, %v480, 0
  %v483 = vshrl.u32 %v482, 5
  %v484 = vand.u32 %v482, 31
  %v485 = vsub.s32 32, %v484
  %v486 = vshrl.u32 683565275, %v485
  %v487 = vshll.u32 683565275, %v484
  %v488 = vshrl.u32 2475754826, %v485
  %v489 = vor.u32 %v487, %v488
  %v490 = vshll.u32 2475754826, %v484
  %v491 = vshrl.u32 2131351028, %v485
  %v492 = vor.u32 %v490, %v491
  %v493 = vshll.u32 2131351028, %v484
  %v494 = vshrl.u32 2102212464, %v485
  %v495 = vor.u32 %v493, %v494
  %v496 = vshll.u32 2102212464, %v484
  %v497 = vshrl.u32 920167782, %v485
  %v498 = vor.u32 %v496, %v497
  %v499 = vshll.u32 920167782, %v484
  %v500 = vshrl.u32 1326507024, %v485
  %v501 = vor.u32 %v499, %v500
  %vm502 = vcmp.lt.s32.totalorder %v483, 1
  %vm503 = vcmp.lt.s32.totalorder %v483, 2
  %vm504 = vcmp.lt.s32.totalorder %v483, 3
  %vm505 = vcmp.lt.s32.totalorder %v483, 4
  %v506 = vsel %vm502, %v486, %v489
  %v507 = vsel %vm505, %v495, 2102212464
  %v508 = vsel %vm504, %v492, %v507
  %v509 = vsel %vm503, %v506, %v508
  %v510 = vsel %vm502, %v489, %v492
  %v511 = vsel %vm505, %v498, 920167782
  %v512 = vsel %vm504, %v495, %v511
  %v513 = vsel %vm503, %v510, %v512
  %v514 = vsel %vm502, %v492, %v495
  %v515 = vsel %vm505, %v501, 1326507024
  %v516 = vsel %vm504, %v498, %v515
  %v517 = vsel %vm503, %v514, %v516
  %v518 = vshll.u32 %v478, 8
  %v519 = vmul.u32.u64.compose %v518, %v517
  %v520 = vextract.low.u32 %v519
  %v521 = vextract.high.u32 %v519
  %v522 = vmul.u32.u64.compose %v518, %v513
  %v523 = vextract.low.u32 %v522
  %v524 = vextract.high.u32 %v522
  %v525 = vmul.u32 %v518, %v509
  %v526 = vadd.s32 %v521, %v523
  %vm527 = vc.u32 %v521, %v523
  %v528 = vadd.s32 %v524, 1
  %v529 = vsel %vm527, %v528, %v524
  %v530 = vadd.s32 %v525, %v529
  %v531 = vadd.s32 %v530, 536870912
  %v532 = vshrl.u32 %v531, 30
  %v533 = vshll.u32 %v532, 30
  %v534 = vsub.s32 %v530, %v533
  %vm535 = vcmp.lt.s32.totalorder %v534, 0
  %v536 = vsub.s32 0, %v534
  %v537 = vsel %vm535, %v536, %v534
  %v538 = vclz %v537
  %v539 = vsub.s32 %v538, 2
  %vm540 = vcmp.gt.s32.totalorder 0, %v539
  %v541 = vsel %vm540, 0, %v539
  %v542 = vsub.s32 32, %v541
  %v543 = vshll.u32 %v534, %v541
  %v544 = vshrl.u32 %v526, %v542
  %v545 = vor.u32 %v543, %v544
  %v546 = vsub.s32 4294967266, %v541
  %v547 = vadd.s32 %v546, 127
  %v548 = vshll.u32 %v547, 23
  %v549 = vor.u32 4788187, %v548
  %v550 = vand.u32 2147483647, %v549
  %v552 = vcvt.s32.f32 %v545
  %v553 = vmul.f32 %v552, %v550
  %v554 = vxor.u32 %v553, 2147483648
  %v555 = vsel %vm472, %v554, %v553
  %v556 = vsub.s32 4, %v532
  %v557 = vsel %vm472, %v556, %v532
  %v558 = vsel %vm471, %v155, %v555
  %v559 = vsel %vm471, 0, %v557
  %v560 = vcosq.f32.pop %v558
  %v561 = vsinq.f32.pop %v558
  %vm562 = vweird.f32 %v155
  %v563 = vadd.s32 %v559, 3
  %v564 = vand.u32 %v563, 3
  %vm565 = vcmp.lt.s32.totalorder %v564, 2
  %vm566 = vcmp.eq.s32.totalorder %v564, 0
  %v567 = vxor.u32 %v561, 2147483648
  %v568 = vsel %vm566, %v560, %v567
  %vm569 = vcmp.eq.s32.totalorder %v564, 2
  %v570 = vxor.u32 %v560, 2147483648
  %v571 = vsel %vm569, %v570, %v561
  %v572 = vsel %vm565, %v568, %v571
  %v573 = vsel %vm562, nan, %v572
  %v574 = vld [vmem:[%s3] sm:$0xff]
  %v575 = vld [vmem:[%s3 + $0x8] sm:$0xff]
  %v576 = vld [vmem:[%s3 + $0x10] sm:$0xff]
  %v577 = vld [vmem:[%s3 + $0x18] sm:$0xff]
  %v578 = vld [vmem:[%s4] sm:$0xff]
  %v579 = vld [vmem:[%s4 + $0x8] sm:$0xff]
  %v580 = vld [vmem:[%s4 + $0x10] sm:$0xff]
  %v581 = vld [vmem:[%s4 + $0x18] sm:$0xff]
  %583 = vset.pattern.permute.xlu0 0
  %584 = vperm.xlu0 %583, %v578
  %v585 = vpop.permute.xlu0 %584
  %588 = vset.pattern.permute.xlu0 0
  %589 = vperm.xlu0 %588, %v579
  %v590 = vpop.permute.xlu0 %589
  %593 = vset.pattern.permute.xlu0 0
  %594 = vperm.xlu0 %593, %v580
  %v595 = vpop.permute.xlu0 %594
  %598 = vset.pattern.permute.xlu0 0
  %599 = vperm.xlu0 %598, %v581
  %v600 = vpop.permute.xlu0 %599
  %vm602 = vcmask 261120
  %v604 = vsel %vm602, %v574, 0
  %v607 = vsel %vm602, %v575, 0
  %v610 = vsel %vm602, %v576, 0
  %v613 = vsel %vm602, %v577, 0
  %615 = vmatprep.subr.mxu0 0.0
  %616 = vmatpush1.msra.mxu0 %v261
  %617 = vmatprep.subr.mxu0 0.0
  %618 = vmatpush1.msra.mxu0 %v365
  %619 = vmatprep.subr.mxu0 0.0
  %620 = vmatpush1.msra.mxu0 %v469
  %621 = vmatprep.subr.mxu0 0.0
  %622 = vmatpush1.msra.mxu0 %v573
  %623 = vmatprep.subr.mxu0 0.0
  %624 = vmatpush1.msra.mxu0 0.0
  %625 = vmatprep.subr.mxu0 0.0
  %626 = vmatpush1.msra.mxu0 0.0
  %627 = vmatprep.subr.mxu0 0.0
  %628 = vmatpush1.msra.mxu0 0.0
  %629 = vmatprep.subr.mxu0 0.0
  %630 = vmatpush1.msra.mxu0 0.0
  %631 = vmatprep.subr.mxu0 0.0
  %632 = vmatpush1.msra.mxu0 0.0
  %633 = vmatprep.subr.mxu0 0.0
  %634 = vmatpush1.msra.mxu0 0.0
  %635 = vmatprep.subr.mxu0 0.0
  %636 = vmatpush1.msra.mxu0 0.0
  %637 = vmatprep.subr.mxu0 0.0
  %638 = vmatpush1.msra.mxu0 0.0
  %639 = vmatprep.subr.mxu0 0.0
  %640 = vmatpush1.msra.mxu0 0.0
  %641 = vmatprep.subr.mxu0 0.0
  %642 = vmatpush1.msra.mxu0 0.0
  %643 = vmatprep.subr.mxu0 0.0
  %644 = vmatpush1.msra.mxu0 0.0
  %645 = vmatprep.subr.mxu0 0.0
  %646 = vmatpush1.msra.mxu0 0.0
  %647 = vmatprep.subr.mxu0 0.0
  %648 = vmatpush1.msra.mxu0 0.0
  %649 = vmatprep.subr.mxu0 0.0
  %650 = vmatpush1.msra.mxu0 0.0
  %651 = vmatprep.subr.mxu0 0.0
  %652 = vmatpush1.msra.mxu0 0.0
  %653 = vmatprep.subr.mxu0 0.0
  %654 = vmatpush1.msra.mxu0 0.0
  %655 = vmatprep.subr.mxu0 0.0
  %656 = vmatpush1.msra.mxu0 0.0
  %657 = vmatprep.subr.mxu0 0.0
  %658 = vmatpush1.msra.mxu0 0.0
  %659 = vmatprep.subr.mxu0 0.0
  %660 = vmatpush1.msra.mxu0 0.0
  %661 = vmatprep.subr.mxu0 0.0
  %662 = vmatpush1.msra.mxu0 0.0
  %663 = vmatprep.subr.mxu0 0.0
  %664 = vmatpush1.msra.mxu0 0.0
  %665 = vmatprep.subr.mxu0 0.0
  %666 = vmatpush1.msra.mxu0 0.0
  %667 = vmatprep.subr.mxu0 0.0
  %668 = vmatpush1.msra.mxu0 0.0
  %669 = vmatprep.subr.mxu0 0.0
  %670 = vmatpush1.msra.mxu0 0.0
  %671 = vmatprep.subr.mxu0 0.0
  %672 = vmatpush1.msra.mxu0 0.0
  %673 = vmatprep.subr.mxu0 0.0
  %674 = vmatpush1.msra.mxu0 0.0
  %675 = vmatprep.subr.mxu0 0.0
  %676 = vmatpush1.msra.mxu0 0.0
  %677 = vmatprep.subr.mxu0 0.0
  %678 = vmatpush1.msra.mxu0 0.0
  %679 = vmatprep.mubr.f32.mxu0 0.0
  %680 = vmatmul.mubr.f32.gmra.mrb[0].mxu0 %v604
  %v681 = vpop.f32.mrb[0].mxu0
  %v682 = vadd.f32 %v585, %v681
  %v683 = vpop.f32.mrb[0].mxu0
  %684 = vmatprep.mubr.f32.mxu0 0.0
  %685 = vmatmul.mubr.f32.gmra.mrb[0].mxu0 %v607
  %v686 = vpop.f32.mrb[0].mxu0
  %v687 = vadd.f32 %v590, %v686
  %v688 = vpop.f32.mrb[0].mxu0
  %689 = vmatprep.mubr.f32.mxu0 0.0
  %690 = vmatmul.mubr.f32.gmra.mrb[0].mxu0 %v610
  %v691 = vpop.f32.mrb[0].mxu0
  %v692 = vadd.f32 %v595, %v691
  %v693 = vpop.f32.mrb[0].mxu0
  %694 = vmatprep.mubr.f32.mxu0 0.0
  %695 = vmatmul.mubr.f32.gmra.mrb[0].mxu0 %v613
  %v696 = vpop.f32.mrb[0].mxu0
  %v697 = vadd.f32 %v600, %v696
  %v698 = vpop.f32.mrb[0].mxu0
  %699 = vdwg.mxu0
  %v700 = vand.u32 2147483647, %v682
  %vm701 = vcmp.le.f32.partialorder %v700, 0.7853982
  %vm702 = vcmp.lt.s32.totalorder %v682, 0
  %v703 = vand.u32 %v682, 2139095040
  %v704 = vshrl.u32 %v703, 23
  %v705 = vsub.s32 %v704, 127
  %v706 = vand.u32 2147483647, %v682
  %v707 = vand.u32 %v706, 8388607
  %v708 = vor.u32 %v707, 8388608
  %v709 = vsub.s32 0, %v708
  %v710 = vadd.s32 %v705, 1
  %vm711 = vcmp.gt.s32.totalorder %v710, 0
  %v712 = vsel %vm711, %v710, 0
  %v713 = vshrl.u32 %v712, 5
  %v714 = vand.u32 %v712, 31
  %v715 = vsub.s32 32, %v714
  %v716 = vshrl.u32 683565275, %v715
  %v717 = vshll.u32 683565275, %v714
  %v718 = vshrl.u32 2475754826, %v715
  %v719 = vor.u32 %v717, %v718
  %v720 = vshll.u32 2475754826, %v714
  %v721 = vshrl.u32 2131351028, %v715
  %v722 = vor.u32 %v720, %v721
  %v723 = vshll.u32 2131351028, %v714
  %v724 = vshrl.u32 2102212464, %v715
  %v725 = vor.u32 %v723, %v724
  %v726 = vshll.u32 2102212464, %v714
  %v727 = vshrl.u32 920167782, %v715
  %v728 = vor.u32 %v726, %v727
  %v729 = vshll.u32 920167782, %v714
  %v730 = vshrl.u32 1326507024, %v715
  %v731 = vor.u32 %v729, %v730
  %vm732 = vcmp.lt.s32.totalorder %v713, 1
  %vm733 = vcmp.lt.s32.totalorder %v713, 2
  %vm734 = vcmp.lt.s32.totalorder %v713, 3
  %vm735 = vcmp.lt.s32.totalorder %v713, 4
  %v736 = vsel %vm732, %v716, %v719
  %v737 = vsel %vm735, %v725, 2102212464
  %v738 = vsel %vm734, %v722, %v737
  %v739 = vsel %vm733, %v736, %v738
  %v740 = vsel %vm732, %v719, %v722
  %v741 = vsel %vm735, %v728, 920167782
  %v742 = vsel %vm734, %v725, %v741
  %v743 = vsel %vm733, %v740, %v742
  %v744 = vsel %vm732, %v722, %v725
  %v745 = vsel %vm735, %v731, 1326507024
  %v746 = vsel %vm734, %v728, %v745
  %v747 = vsel %vm733, %v744, %v746
  %v748 = vshll.u32 %v708, 8
  %v749 = vmul.u32.u64.compose %v748, %v747
  %v750 = vextract.low.u32 %v749
  %v751 = vextract.high.u32 %v749
  %v752 = vmul.u32.u64.compose %v748, %v743
  %v753 = vextract.low.u32 %v752
  %v754 = vextract.high.u32 %v752
  %v755 = vmul.u32 %v748, %v739
  %v756 = vadd.s32 %v751, %v753
  %vm757 = vc.u32 %v751, %v753
  %v758 = vadd.s32 %v754, 1
  %v759 = vsel %vm757, %v758, %v754
  %v760 = vadd.s32 %v755, %v759
  %v761 = vadd.s32 %v760, 536870912
  %v762 = vshrl.u32 %v761, 30
  %v763 = vshll.u32 %v762, 30
  %v764 = vsub.s32 %v760, %v763
  %vm765 = vcmp.lt.s32.totalorder %v764, 0
  %v766 = vsub.s32 0, %v764
  %v767 = vsel %vm765, %v766, %v764
  %v768 = vclz %v767
  %v769 = vsub.s32 %v768, 2
  %vm770 = vcmp.gt.s32.totalorder 0, %v769
  %v771 = vsel %vm770, 0, %v769
  %v772 = vsub.s32 32, %v771
  %v773 = vshll.u32 %v764, %v771
  %v774 = vshrl.u32 %v756, %v772
  %v775 = vor.u32 %v773, %v774
  %v776 = vsub.s32 4294967266, %v771
  %v777 = vadd.s32 %v776, 127
  %v778 = vshll.u32 %v777, 23
  %v779 = vor.u32 4788187, %v778
  %v780 = vand.u32 2147483647, %v779
  %v782 = vcvt.s32.f32 %v775
  %v783 = vmul.f32 %v782, %v780
  %v784 = vxor.u32 %v783, 2147483648
  %v785 = vsel %vm702, %v784, %v783
  %v786 = vsub.s32 4, %v762
  %v787 = vsel %vm702, %v786, %v762
  %v788 = vsel %vm701, %v682, %v785
  %v789 = vsel %vm701, 0, %v787
  %v790 = vcosq.f32.pop %v788
  %v791 = vsinq.f32.pop %v788
  %vm792 = vweird.f32 %v682
  %v793 = vadd.s32 %v789, 3
  %v794 = vand.u32 %v793, 3
  %vm795 = vcmp.lt.s32.totalorder %v794, 2
  %vm796 = vcmp.eq.s32.totalorder %v794, 0
  %v797 = vxor.u32 %v791, 2147483648
  %v798 = vsel %vm796, %v790, %v797
  %vm799 = vcmp.eq.s32.totalorder %v794, 2
  %v800 = vxor.u32 %v790, 2147483648
  %v801 = vsel %vm799, %v800, %v791
  %v802 = vsel %vm795, %v798, %v801
  %v803 = vsel %vm792, nan, %v802
  %v804 = vand.u32 2147483647, %v687
  %vm805 = vcmp.le.f32.partialorder %v804, 0.7853982
  %vm806 = vcmp.lt.s32.totalorder %v687, 0
  %v807 = vand.u32 %v687, 2139095040
  %v808 = vshrl.u32 %v807, 23
  %v809 = vsub.s32 %v808, 127
  %v810 = vand.u32 2147483647, %v687
  %v811 = vand.u32 %v810, 8388607
  %v812 = vor.u32 %v811, 8388608
  %v813 = vsub.s32 0, %v812
  %v814 = vadd.s32 %v809, 1
  %vm815 = vcmp.gt.s32.totalorder %v814, 0
  %v816 = vsel %vm815, %v814, 0
  %v817 = vshrl.u32 %v816, 5
  %v818 = vand.u32 %v816, 31
  %v819 = vsub.s32 32, %v818
  %v820 = vshrl.u32 683565275, %v819
  %v821 = vshll.u32 683565275, %v818
  %v822 = vshrl.u32 2475754826, %v819
  %v823 = vor.u32 %v821, %v822
  %v824 = vshll.u32 2475754826, %v818
  %v825 = vshrl.u32 2131351028, %v819
  %v826 = vor.u32 %v824, %v825
  %v827 = vshll.u32 2131351028, %v818
  %v828 = vshrl.u32 2102212464, %v819
  %v829 = vor.u32 %v827, %v828
  %v830 = vshll.u32 2102212464, %v818
  %v831 = vshrl.u32 920167782, %v819
  %v832 = vor.u32 %v830, %v831
  %v833 = vshll.u32 920167782, %v818
  %v834 = vshrl.u32 1326507024, %v819
  %v835 = vor.u32 %v833, %v834
  %vm836 = vcmp.lt.s32.totalorder %v817, 1
  %vm837 = vcmp.lt.s32.totalorder %v817, 2
  %vm838 = vcmp.lt.s32.totalorder %v817, 3
  %vm839 = vcmp.lt.s32.totalorder %v817, 4
  %v840 = vsel %vm836, %v820, %v823
  %v841 = vsel %vm839, %v829, 2102212464
  %v842 = vsel %vm838, %v826, %v841
  %v843 = vsel %vm837, %v840, %v842
  %v844 = vsel %vm836, %v823, %v826
  %v845 = vsel %vm839, %v832, 920167782
  %v846 = vsel %vm838, %v829, %v845
  %v847 = vsel %vm837, %v844, %v846
  %v848 = vsel %vm836, %v826, %v829
  %v849 = vsel %vm839, %v835, 1326507024
  %v850 = vsel %vm838, %v832, %v849
  %v851 = vsel %vm837, %v848, %v850
  %v852 = vshll.u32 %v812, 8
  %v853 = vmul.u32.u64.compose %v852, %v851
  %v854 = vextract.low.u32 %v853
  %v855 = vextract.high.u32 %v853
  %v856 = vmul.u32.u64.compose %v852, %v847
  %v857 = vextract.low.u32 %v856
  %v858 = vextract.high.u32 %v856
  %v859 = vmul.u32 %v852, %v843
  %v860 = vadd.s32 %v855, %v857
  %vm861 = vc.u32 %v855, %v857
  %v862 = vadd.s32 %v858, 1
  %v863 = vsel %vm861, %v862, %v858
  %v864 = vadd.s32 %v859, %v863
  %v865 = vadd.s32 %v864, 536870912
  %v866 = vshrl.u32 %v865, 30
  %v867 = vshll.u32 %v866, 30
  %v868 = vsub.s32 %v864, %v867
  %vm869 = vcmp.lt.s32.totalorder %v868, 0
  %v870 = vsub.s32 0, %v868
  %v871 = vsel %vm869, %v870, %v868
  %v872 = vclz %v871
  %v873 = vsub.s32 %v872, 2
  %vm874 = vcmp.gt.s32.totalorder 0, %v873
  %v875 = vsel %vm874, 0, %v873
  %v876 = vsub.s32 32, %v875
  %v877 = vshll.u32 %v868, %v875
  %v878 = vshrl.u32 %v860, %v876
  %v879 = vor.u32 %v877, %v878
  %v880 = vsub.s32 4294967266, %v875
  %v881 = vadd.s32 %v880, 127
  %v882 = vshll.u32 %v881, 23
  %v883 = vor.u32 4788187, %v882
  %v884 = vand.u32 2147483647, %v883
  %v886 = vcvt.s32.f32 %v879
  %v887 = vmul.f32 %v886, %v884
  %v888 = vxor.u32 %v887, 2147483648
  %v889 = vsel %vm806, %v888, %v887
  %v890 = vsub.s32 4, %v866
  %v891 = vsel %vm806, %v890, %v866
  %v892 = vsel %vm805, %v687, %v889
  %v893 = vsel %vm805, 0, %v891
  %v894 = vcosq.f32.pop %v892
  %v895 = vsinq.f32.pop %v892
  %vm896 = vweird.f32 %v687
  %v897 = vadd.s32 %v893, 3
  %v898 = vand.u32 %v897, 3
  %vm899 = vcmp.lt.s32.totalorder %v898, 2
  %vm900 = vcmp.eq.s32.totalorder %v898, 0
  %v901 = vxor.u32 %v895, 2147483648
  %v902 = vsel %vm900, %v894, %v901
  %vm903 = vcmp.eq.s32.totalorder %v898, 2
  %v904 = vxor.u32 %v894, 2147483648
  %v905 = vsel %vm903, %v904, %v895
  %v906 = vsel %vm899, %v902, %v905
  %v907 = vsel %vm896, nan, %v906
  %v908 = vand.u32 2147483647, %v692
  %vm909 = vcmp.le.f32.partialorder %v908, 0.7853982
  %vm910 = vcmp.lt.s32.totalorder %v692, 0
  %v911 = vand.u32 %v692, 2139095040
  %v912 = vshrl.u32 %v911, 23
  %v913 = vsub.s32 %v912, 127
  %v914 = vand.u32 2147483647, %v692
  %v915 = vand.u32 %v914, 8388607
  %v916 = vor.u32 %v915, 8388608
  %v917 = vsub.s32 0, %v916
  %v918 = vadd.s32 %v913, 1
  %vm919 = vcmp.gt.s32.totalorder %v918, 0
  %v920 = vsel %vm919, %v918, 0
  %v921 = vshrl.u32 %v920, 5
  %v922 = vand.u32 %v920, 31
  %v923 = vsub.s32 32, %v922
  %v924 = vshrl.u32 683565275, %v923
  %v925 = vshll.u32 683565275, %v922
  %v926 = vshrl.u32 2475754826, %v923
  %v927 = vor.u32 %v925, %v926
  %v928 = vshll.u32 2475754826, %v922
  %v929 = vshrl.u32 2131351028, %v923
  %v930 = vor.u32 %v928, %v929
  %v931 = vshll.u32 2131351028, %v922
  %v932 = vshrl.u32 2102212464, %v923
  %v933 = vor.u32 %v931, %v932
  %v934 = vshll.u32 2102212464, %v922
  %v935 = vshrl.u32 920167782, %v923
  %v936 = vor.u32 %v934, %v935
  %v937 = vshll.u32 920167782, %v922
  %v938 = vshrl.u32 1326507024, %v923
  %v939 = vor.u32 %v937, %v938
  %vm940 = vcmp.lt.s32.totalorder %v921, 1
  %vm941 = vcmp.lt.s32.totalorder %v921, 2
  %vm942 = vcmp.lt.s32.totalorder %v921, 3
  %vm943 = vcmp.lt.s32.totalorder %v921, 4
  %v944 = vsel %vm940, %v924, %v927
  %v945 = vsel %vm943, %v933, 2102212464
  %v946 = vsel %vm942, %v930, %v945
  %v947 = vsel %vm941, %v944, %v946
  %v948 = vsel %vm940, %v927, %v930
  %v949 = vsel %vm943, %v936, 920167782
  %v950 = vsel %vm942, %v933, %v949
  %v951 = vsel %vm941, %v948, %v950
  %v952 = vsel %vm940, %v930, %v933
  %v953 = vsel %vm943, %v939, 1326507024
  %v954 = vsel %vm942, %v936, %v953
  %v955 = vsel %vm941, %v952, %v954
  %v956 = vshll.u32 %v916, 8
  %v957 = vmul.u32.u64.compose %v956, %v955
  %v958 = vextract.low.u32 %v957
  %v959 = vextract.high.u32 %v957
  %v960 = vmul.u32.u64.compose %v956, %v951
  %v961 = vextract.low.u32 %v960
  %v962 = vextract.high.u32 %v960
  %v963 = vmul.u32 %v956, %v947
  %v964 = vadd.s32 %v959, %v961
  %vm965 = vc.u32 %v959, %v961
  %v966 = vadd.s32 %v962, 1
  %v967 = vsel %vm965, %v966, %v962
  %v968 = vadd.s32 %v963, %v967
  %v969 = vadd.s32 %v968, 536870912
  %v970 = vshrl.u32 %v969, 30
  %v971 = vshll.u32 %v970, 30
  %v972 = vsub.s32 %v968, %v971
  %vm973 = vcmp.lt.s32.totalorder %v972, 0
  %v974 = vsub.s32 0, %v972
  %v975 = vsel %vm973, %v974, %v972
  %v976 = vclz %v975
  %v977 = vsub.s32 %v976, 2
  %vm978 = vcmp.gt.s32.totalorder 0, %v977
  %v979 = vsel %vm978, 0, %v977
  %v980 = vsub.s32 32, %v979
  %v981 = vshll.u32 %v972, %v979
  %v982 = vshrl.u32 %v964, %v980
  %v983 = vor.u32 %v981, %v982
  %v984 = vsub.s32 4294967266, %v979
  %v985 = vadd.s32 %v984, 127
  %v986 = vshll.u32 %v985, 23
  %v987 = vor.u32 4788187, %v986
  %v988 = vand.u32 2147483647, %v987
  %v990 = vcvt.s32.f32 %v983
  %v991 = vmul.f32 %v990, %v988
  %v992 = vxor.u32 %v991, 2147483648
  %v993 = vsel %vm910, %v992, %v991
  %v994 = vsub.s32 4, %v970
  %v995 = vsel %vm910, %v994, %v970
  %v996 = vsel %vm909, %v692, %v993
  %v997 = vsel %vm909, 0, %v995
  %v998 = vcosq.f32.pop %v996
  %v999 = vsinq.f32.pop %v996
  %vm1000 = vweird.f32 %v692
  %v1001 = vadd.s32 %v997, 3
  %v1002 = vand.u32 %v1001, 3
  %vm1003 = vcmp.lt.s32.totalorder %v1002, 2
  %vm1004 = vcmp.eq.s32.totalorder %v1002, 0
  %v1005 = vxor.u32 %v999, 2147483648
  %v1006 = vsel %vm1004, %v998, %v1005
  %vm1007 = vcmp.eq.s32.totalorder %v1002, 2
  %v1008 = vxor.u32 %v998, 2147483648
  %v1009 = vsel %vm1007, %v1008, %v999
  %v1010 = vsel %vm1003, %v1006, %v1009
  %v1011 = vsel %vm1000, nan, %v1010
  %v1012 = vand.u32 2147483647, %v697
  %vm1013 = vcmp.le.f32.partialorder %v1012, 0.7853982
  %vm1014 = vcmp.lt.s32.totalorder %v697, 0
  %v1015 = vand.u32 %v697, 2139095040
  %v1016 = vshrl.u32 %v1015, 23
  %v1017 = vsub.s32 %v1016, 127
  %v1018 = vand.u32 2147483647, %v697
  %v1019 = vand.u32 %v1018, 8388607
  %v1020 = vor.u32 %v1019, 8388608
  %v1021 = vsub.s32 0, %v1020
  %v1022 = vadd.s32 %v1017, 1
  %vm1023 = vcmp.gt.s32.totalorder %v1022, 0
  %v1024 = vsel %vm1023, %v1022, 0
  %v1025 = vshrl.u32 %v1024, 5
  %v1026 = vand.u32 %v1024, 31
  %v1027 = vsub.s32 32, %v1026
  %v1028 = vshrl.u32 683565275, %v1027
  %v1029 = vshll.u32 683565275, %v1026
  %v1030 = vshrl.u32 2475754826, %v1027
  %v1031 = vor.u32 %v1029, %v1030
  %v1032 = vshll.u32 2475754826, %v1026
  %v1033 = vshrl.u32 2131351028, %v1027
  %v1034 = vor.u32 %v1032, %v1033
  %v1035 = vshll.u32 2131351028, %v1026
  %v1036 = vshrl.u32 2102212464, %v1027
  %v1037 = vor.u32 %v1035, %v1036
  %v1038 = vshll.u32 2102212464, %v1026
  %v1039 = vshrl.u32 920167782, %v1027
  %v1040 = vor.u32 %v1038, %v1039
  %v1041 = vshll.u32 920167782, %v1026
  %v1042 = vshrl.u32 1326507024, %v1027
  %v1043 = vor.u32 %v1041, %v1042
  %vm1044 = vcmp.lt.s32.totalorder %v1025, 1
  %vm1045 = vcmp.lt.s32.totalorder %v1025, 2
  %vm1046 = vcmp.lt.s32.totalorder %v1025, 3
  %vm1047 = vcmp.lt.s32.totalorder %v1025, 4
  %v1048 = vsel %vm1044, %v1028, %v1031
  %v1049 = vsel %vm1047, %v1037, 2102212464
  %v1050 = vsel %vm1046, %v1034, %v1049
  %v1051 = vsel %vm1045, %v1048, %v1050
  %v1052 = vsel %vm1044, %v1031, %v1034
  %v1053 = vsel %vm1047, %v1040, 920167782
  %v1054 = vsel %vm1046, %v1037, %v1053
  %v1055 = vsel %vm1045, %v1052, %v1054
  %v1056 = vsel %vm1044, %v1034, %v1037
  %v1057 = vsel %vm1047, %v1043, 1326507024
  %v1058 = vsel %vm1046, %v1040, %v1057
  %v1059 = vsel %vm1045, %v1056, %v1058
  %v1060 = vshll.u32 %v1020, 8
  %v1061 = vmul.u32.u64.compose %v1060, %v1059
  %v1062 = vextract.low.u32 %v1061
  %v1063 = vextract.high.u32 %v1061
  %v1064 = vmul.u32.u64.compose %v1060, %v1055
  %v1065 = vextract.low.u32 %v1064
  %v1066 = vextract.high.u32 %v1064
  %v1067 = vmul.u32 %v1060, %v1051
  %v1068 = vadd.s32 %v1063, %v1065
  %vm1069 = vc.u32 %v1063, %v1065
  %v1070 = vadd.s32 %v1066, 1
  %v1071 = vsel %vm1069, %v1070, %v1066
  %v1072 = vadd.s32 %v1067, %v1071
  %v1073 = vadd.s32 %v1072, 536870912
  %v1074 = vshrl.u32 %v1073, 30
  %v1075 = vshll.u32 %v1074, 30
  %v1076 = vsub.s32 %v1072, %v1075
  %vm1077 = vcmp.lt.s32.totalorder %v1076, 0
  %v1078 = vsub.s32 0, %v1076
  %v1079 = vsel %vm1077, %v1078, %v1076
  %v1080 = vclz %v1079
  %v1081 = vsub.s32 %v1080, 2
  %vm1082 = vcmp.gt.s32.totalorder 0, %v1081
  %v1083 = vsel %vm1082, 0, %v1081
  %v1084 = vsub.s32 32, %v1083
  %v1085 = vshll.u32 %v1076, %v1083
  %v1086 = vshrl.u32 %v1068, %v1084
  %v1087 = vor.u32 %v1085, %v1086
  %v1088 = vsub.s32 4294967266, %v1083
  %v1089 = vadd.s32 %v1088, 127
  %v1090 = vshll.u32 %v1089, 23
  %v1091 = vor.u32 4788187, %v1090
  %v1092 = vand.u32 2147483647, %v1091
  %v1094 = vcvt.s32.f32 %v1087
  %v1095 = vmul.f32 %v1094, %v1092
  %v1096 = vxor.u32 %v1095, 2147483648
  %v1097 = vsel %vm1014, %v1096, %v1095
  %v1098 = vsub.s32 4, %v1074
  %v1099 = vsel %vm1014, %v1098, %v1074
  %v1100 = vsel %vm1013, %v697, %v1097
  %v1101 = vsel %vm1013, 0, %v1099
  %v1102 = vcosq.f32.pop %v1100
  %v1103 = vsinq.f32.pop %v1100
  %vm1104 = vweird.f32 %v697
  %v1105 = vadd.s32 %v1101, 3
  %v1106 = vand.u32 %v1105, 3
  %vm1107 = vcmp.lt.s32.totalorder %v1106, 2
  %vm1108 = vcmp.eq.s32.totalorder %v1106, 0
  %v1109 = vxor.u32 %v1103, 2147483648
  %v1110 = vsel %vm1108, %v1102, %v1109
  %vm1111 = vcmp.eq.s32.totalorder %v1106, 2
  %v1112 = vxor.u32 %v1102, 2147483648
  %v1113 = vsel %vm1111, %v1112, %v1103
  %v1114 = vsel %vm1107, %v1110, %v1113
  %v1115 = vsel %vm1104, nan, %v1114
  %v1116 = vld [vmem:[%s5] sm:$0xf]
  %v1117 = vld [vmem:[%s6] sm:$0xf]
  %1119 = vset.pattern.permute.xlu0 0
  %1120 = vperm.xlu0 %1119, %v1117
  %v1121 = vpop.permute.xlu0 %1120
  %v1124 = vsel %vm602, %v1116, 0
  %1126 = vmatprep.subr.mxu0 0.0
  %1127 = vmatpush1.msra.mxu0 %v803
  %1128 = vmatprep.subr.mxu0 0.0
  %1129 = vmatpush1.msra.mxu0 %v907
  %1130 = vmatprep.subr.mxu0 0.0
  %1131 = vmatpush1.msra.mxu0 %v1011
  %1132 = vmatprep.subr.mxu0 0.0
  %1133 = vmatpush1.msra.mxu0 %v1115
  %1134 = vmatprep.subr.mxu0 0.0
  %1135 = vmatpush1.msra.mxu0 0.0
  %1136 = vmatprep.subr.mxu0 0.0
  %1137 = vmatpush1.msra.mxu0 0.0
  %1138 = vmatprep.subr.mxu0 0.0
  %1139 = vmatpush1.msra.mxu0 0.0
  %1140 = vmatprep.subr.mxu0 0.0
  %1141 = vmatpush1.msra.mxu0 0.0
  %1142 = vmatprep.subr.mxu0 0.0
  %1143 = vmatpush1.msra.mxu0 0.0
  %1144 = vmatprep.subr.mxu0 0.0
  %1145 = vmatpush1.msra.mxu0 0.0
  %1146 = vmatprep.subr.mxu0 0.0
  %1147 = vmatpush1.msra.mxu0 0.0
  %1148 = vmatprep.subr.mxu0 0.0
  %1149 = vmatpush1.msra.mxu0 0.0
  %1150 = vmatprep.subr.mxu0 0.0
  %1151 = vmatpush1.msra.mxu0 0.0
  %1152 = vmatprep.subr.mxu0 0.0
  %1153 = vmatpush1.msra.mxu0 0.0
  %1154 = vmatprep.subr.mxu0 0.0
  %1155 = vmatpush1.msra.mxu0 0.0
  %1156 = vmatprep.subr.mxu0 0.0
  %1157 = vmatpush1.msra.mxu0 0.0
  %1158 = vmatprep.subr.mxu0 0.0
  %1159 = vmatpush1.msra.mxu0 0.0
  %1160 = vmatprep.subr.mxu0 0.0
  %1161 = vmatpush1.msra.mxu0 0.0
  %1162 = vmatprep.subr.mxu0 0.0
  %1163 = vmatpush1.msra.mxu0 0.0
  %1164 = vmatprep.subr.mxu0 0.0
  %1165 = vmatpush1.msra.mxu0 0.0
  %1166 = vmatprep.subr.mxu0 0.0
  %1167 = vmatpush1.msra.mxu0 0.0
  %1168 = vmatprep.subr.mxu0 0.0
  %1169 = vmatpush1.msra.mxu0 0.0
  %1170 = vmatprep.subr.mxu0 0.0
  %1171 = vmatpush1.msra.mxu0 0.0
  %1172 = vmatprep.subr.mxu0 0.0
  %1173 = vmatpush1.msra.mxu0 0.0
  %1174 = vmatprep.subr.mxu0 0.0
  %1175 = vmatpush1.msra.mxu0 0.0
  %1176 = vmatprep.subr.mxu0 0.0
  %1177 = vmatpush1.msra.mxu0 0.0
  %1178 = vmatprep.subr.mxu0 0.0
  %1179 = vmatpush1.msra.mxu0 0.0
  %1180 = vmatprep.subr.mxu0 0.0
  %1181 = vmatpush1.msra.mxu0 0.0
  %1182 = vmatprep.subr.mxu0 0.0
  %1183 = vmatpush1.msra.mxu0 0.0
  %1184 = vmatprep.subr.mxu0 0.0
  %1185 = vmatpush1.msra.mxu0 0.0
  %1186 = vmatprep.subr.mxu0 0.0
  %1187 = vmatpush1.msra.mxu0 0.0
  %1188 = vmatprep.subr.mxu0 0.0
  %1189 = vmatpush1.msra.mxu0 0.0
  %1190 = vmatprep.mubr.f32.mxu0 0.0
  %1191 = vmatmul.mubr.f32.gmra.mrb[0].mxu0 %v1124
  %v1192 = vpop.f32.mrb[0].mxu0
  %v1193 = vadd.f32 %v1121, %v1192
  %v1194 = vpop.f32.mrb[0].mxu0
  %1195 = vdwg.mxu0
  %1196 = vst [vmem:[%s7] sm:$0xf] %v1193
  // Predicated region
  $region30: #{edge_block_forward.1} parent=0 // pred_check
    _
  $region31: #{edge_block_forward.1} parent=0 // pred_check_branch
    %1198 = sbr.rel (0) target = $region33
  $region32: #{edge_block_forward.1} parent=0 // pred_region
    _
  $region33: #{edge_block_forward.1} parent=0 // pred_fallthru
    _
  // Predicated region
  $region34: #{edge_block_forward.1} parent=0 // pred_check
    _
  $region35: #{edge_block_forward.1} parent=0 // pred_check_branch
    %1200 = sbr.rel (0) target = $region37
  $region36: #{edge_block_forward.1} parent=0 // pred_region
    _
  $region37: #{edge_block_forward.1} parent=0 // pred_fallthru
    _

</llo_original>
